<compile_context>
chip_gen: v7x
topology: tpu7x:2x2x1
jax: 0.10.0
libtpu: 0.0.40
codegen_flags: <defaults>
</compile_context>

<pallas_src>
import functools

import jax
import jax.numpy as jnp
from jax.experimental import pallas as pl
from jax.experimental.pallas import tpu as pltpu

_HIDDEN = 64
_OUT = 256
_LN_EPS = 1e-5


def _round_up(n, m):
    return ((n + m - 1) // m) * m


def _subgraph_kernel(x_ref, w1_ref, b1_ref, w2_ref, b2_ref, o_ref):
    # x_ref: (TB, C_in)  w1_ref: (C_in, 64)  b1_ref: (1, 64)
    # w2_ref: (64, 256)  b2_ref: (1, 256)    o_ref:  (TB, 256)
    x = x_ref[...]

    # fc: Linear(C_in, 64) on the MXU (otherwise idle except for fc2).
    h = jnp.dot(x, w1_ref[...], preferred_element_type=jnp.float32) + b1_ref[...]

    # layer_norm over normalized_shape=(1, 64): per-row stats over the 64
    # features, elementwise_affine=False, eps=1e-5.  Row reductions go to the
    # MXU (dot with a ones column) so the XLU (only 2 units on v6e/v7x) stays
    # off the critical path.  Two-pass variance matches PyTorch numerics.
    ones = jnp.ones((_HIDDEN, 1), jnp.float32)
    inv_n = 1.0 / _HIDDEN
    mean = jnp.dot(h, ones, preferred_element_type=jnp.float32) * inv_n      # (TB, 1)
    centered = h - mean
    var = jnp.dot(centered * centered, ones,
                  preferred_element_type=jnp.float32) * inv_n                # (TB, 1)
    # NOTE: rows beyond B in the last (padded) tile carry arbitrary data; LN is
    # strictly per-row and those rows are masked on the output store, so they
    # cannot contaminate real rows.
    hn = jnp.maximum(centered * jax.lax.rsqrt(var + _LN_EPS), 0.0)

    # fc2: Linear(64, 256) on the MXU, f32 accumulation, then relu.
    # TODO(synk): optionally run this dot in bf16 (bf16 hn/w2, f32 acc) if
    # bit-exact f32 math is not required by the consumer.
    out = jnp.dot(hn, w2_ref[...], preferred_element_type=jnp.float32) + b2_ref[...]
    o_ref[...] = jnp.maximum(out, 0.0).astype(o_ref.dtype)


def _tile_config(batch):
    """Pick (batch tile, scoped-VMEM limit) per TPU generation."""
    try:
        vmem_cap = pltpu.get_tpu_info().vmem_capacity_bytes
    except Exception:  # non-TPU backend / older jax: assume v7x-sized VMEM
        vmem_cap = 64 << 20

    # Lane-padded per-row VMEM footprint (f32):
    #   x block (TB, 4) padded to 128 lanes, double-buffered:  ~1 KiB/row
    #   out block (TB, 256), double-buffered:                   2 KiB/row
    #   in-kernel intermediates (h, centered, out, ...):       ~3 KiB/row
    # => ~6 KiB/row.  TB=8192 (~50 MiB) on 128 MiB parts (v5e/v6e),
    #    TB=4096 (~26 MiB) on 64 MiB parts (v7x).
    max_tb = 8192 if vmem_cap >= (96 << 20) else 4096

    # Balanced tiling: keep an even number of equal-sized tiles so the
    # "parallel" batch axis splits evenly across v7x's two TensorCores instead
    # of one full tile plus a small remainder.  Single-tile problems stay
    # single-tile; on single-TC chips this costs at most one extra grid step.
    n_tiles = pl.cdiv(batch, max_tb)
    if n_tiles > 1:
        n_tiles = _round_up(n_tiles, 2)
    tb = min(max_tb, max(8, _round_up(pl.cdiv(batch, n_tiles), 8)))

    need = tb * 6 * 1024 + (2 << 20)
    vmem_limit = max(32 << 20, min(need, vmem_cap * 3 // 4))
    return tb, int(vmem_limit)


@functools.partial(jax.jit, static_argnames=("tb", "vmem_limit", "out_dtype"))
def _subgraph_impl(x, w1, b1, w2, b2, *, tb, vmem_limit, out_dtype):
    B = x.shape[0]
    c_in = x.shape[-1]
    x2d = x.reshape(B, c_in)
    b1_2d = b1.reshape(1, _HIDDEN)
    b2_2d = b2.reshape(1, _OUT)

    grid = (pl.cdiv(B, tb),)
    out_bytes = jnp.dtype(out_dtype).itemsize

    cost = pl.CostEstimate(
        flops=B * (2 * c_in * _HIDDEN + 2 * _HIDDEN * _OUT + 4 * _HIDDEN),
        transcendentals=B,  # one rsqrt per row
        bytes_accessed=(
            B * (c_in * 4 + _OUT * out_bytes)
            + (c_in * _HIDDEN + _HIDDEN + _HIDDEN * _OUT + _OUT) * 4
        ),
    )

    return pl.pallas_call(
        _subgraph_kernel,
        out_shape=jax.ShapeDtypeStruct((B, _OUT), out_dtype),
        grid=grid,
        in_specs=[
            pl.BlockSpec((tb, c_in), lambda i: (i, 0)),       # x: tiled over batch
            pl.BlockSpec((c_in, _HIDDEN), lambda i: (0, 0)),  # w1: resident
            pl.BlockSpec((1, _HIDDEN), lambda i: (0, 0)),     # b1: resident
            pl.BlockSpec((_HIDDEN, _OUT), lambda i: (0, 0)),  # w2: resident
            pl.BlockSpec((1, _OUT), lambda i: (0, 0)),        # b2: resident
        ],
        out_specs=pl.BlockSpec((tb, _OUT), lambda i: (i, 0)),  # lane-dense (256)
        compiler_params=pltpu.CompilerParams(
            dimension_semantics=("parallel",),
            vmem_limit_bytes=vmem_limit,
        ),
        cost_estimate=cost,
    )(x2d, w1, b1_2d, w2, b2_2d)


def subgraph_net4state(x, w1, b1, w2, b2, out_dtype=jnp.float32):
    """x: (B, 1, C_in) -> (B, 256). Weights pre-transposed to (in, out) layout.

    out_dtype=jnp.bfloat16 halves the dominant HBM traffic (the output write)
    at the cost of bf16 rounding vs the f32 PyTorch reference.
    """
    tb, vmem_limit = _tile_config(x.shape[0])
    return _subgraph_impl(x, w1, b1, w2, b2, tb=tb, vmem_limit=vmem_limit,
                          out_dtype=out_dtype)


def init_params(key, input_channels=4):
    """Deterministic synthetic params matching nn.Linear + kaiming_normal_."""
    k1, k2, k3, k4 = jax.random.split(key, 4)
    # fc.weight: (64, input_channels), kaiming_normal_ (fan_in = input_channels)
    std1 = (2.0 / input_channels) ** 0.5
    w1 = jax.random.normal(k1, (_HIDDEN, input_channels), jnp.float32) * std1
    # fc.bias: default uniform(-1/sqrt(fan_in), 1/sqrt(fan_in))
    bound1 = 1.0 / (input_channels ** 0.5)
    b1 = jax.random.uniform(k2, (_HIDDEN,), jnp.float32, -bound1, bound1)
    # fc2.weight: (256, 64)
    std2 = (2.0 / _HIDDEN) ** 0.5
    w2 = jax.random.normal(k3, (_OUT, _HIDDEN), jnp.float32) * std2
    bound2 = 1.0 / (_HIDDEN ** 0.5)
    b2 = jax.random.uniform(k4, (_OUT,), jnp.float32, -bound2, bound2)
    # store transposed as (in, out) for the kernel
    return w1.T, b1, w2.T, b2


def _reference(x, w1, b1, w2, b2):
    """Pure-JAX reference mirroring the PyTorch forward."""
    h = jnp.einsum("blc,co->blo", x, w1) + b1          # (B, 1, 64)
    mean = jnp.mean(h, axis=(1, 2), keepdims=True)
    var = jnp.mean((h - mean) ** 2, axis=(1, 2), keepdims=True)
    h = jnp.maximum((h - mean) * jax.lax.rsqrt(var + _LN_EPS), 0.0)
    out = jnp.einsum("blc,co->blo", h, w2) + b2        # (B, 1, 256)
    return jnp.maximum(out, 0.0)[:, 0, :]


if __name__ == "__main__":
    key = jax.random.PRNGKey(0)
    kx, kp = jax.random.split(key)

    B, C = 2, 4
    x = jax.random.normal(kx, (B, 1, C), jnp.float32)   # (batch, seq=1, features)
    w1, b1, w2, b2 = init_params(kp, input_channels=C)

    ref = _reference(x, w1, b1, w2, b2)

    # Default f32 path: bit-comparable to the PyTorch forward.
    out = subgraph_net4state(x, w1, b1, w2, b2)
    out = jax.block_until_ready(out)
    assert out.shape == (B, _OUT), out.shape
    assert out.dtype == jnp.float32, out.dtype
    assert jnp.allclose(out, ref, atol=1e-5, rtol=1e-5), "f32 mismatch vs reference"

    # Optional bf16-output path (halves the dominant HBM write traffic).
    out_bf16 = subgraph_net4state(x, w1, b1, w2, b2, out_dtype=jnp.bfloat16)
    out_bf16 = jax.block_until_ready(out_bf16)
    assert out_bf16.dtype == jnp.bfloat16, out_bf16.dtype
    assert jnp.allclose(out_bf16.astype(jnp.float32), ref, atol=5e-2, rtol=1e-2), (
        "bf16 mismatch vs reference")

    print("KERNEL_OK")
</pallas_src>

<mosaic_0001>
module attributes {stable_mosaic.version = 11 : i64} {
  func.func @_subgraph_kernel(%arg0: i32, %arg1: memref<8x4xf32, #tpu.memory_space<vmem>>, %arg2: memref<4x64xf32, #tpu.memory_space<vmem>>, %arg3: memref<1x64xf32, #tpu.memory_space<vmem>>, %arg4: memref<64x256xf32, #tpu.memory_space<vmem>>, %arg5: memref<1x256xf32, #tpu.memory_space<vmem>>, %arg6: memref<8x256xf32, #tpu.memory_space<vmem>>) attributes {dimension_semantics = [#tpu.dimension_semantics<parallel>], iteration_bounds = array<i64: 1>, scalar_prefetch = 0 : i64, scratch_operands = 0 : i64, tpu.core_type = #tpu.core_type<tc>, window_params = [{transform_indices = @transform_0, window_bounds = array<i64: 8, 4>}, {pipeline_mode = #tpu.pipeline_mode<synchronous>, transform_indices = @transform_1, window_bounds = array<i64: 4, 64>}, {pipeline_mode = #tpu.pipeline_mode<synchronous>, transform_indices = @transform_2, window_bounds = array<i64: 1, 64>}, {pipeline_mode = #tpu.pipeline_mode<synchronous>, transform_indices = @transform_3, window_bounds = array<i64: 64, 256>}, {pipeline_mode = #tpu.pipeline_mode<synchronous>, transform_indices = @transform_4, window_bounds = array<i64: 1, 256>}, {transform_indices = @transform_5, window_bounds = array<i64: 8, 256>}]} {
    %c0 = arith.constant 0 : index
    %c0_0 = arith.constant 0 : index
    %0 = vector.load %arg1[%c0, %c0_0] : memref<8x4xf32, #tpu.memory_space<vmem>>, vector<8x4xf32>
    %c0_1 = arith.constant 0 : index
    %c0_2 = arith.constant 0 : index
    %1 = vector.load %arg2[%c0_1, %c0_2] : memref<4x64xf32, #tpu.memory_space<vmem>>, vector<4x64xf32>
    %cst = arith.constant dense<0.000000e+00> : vector<8x64xf32>
    %2 = tpu.matmul %0, %1, %cst {dimension_numbers = #tpu.dot_dimension_numbers<[1], [0], [0], [1], [0, 0, 1, 1], [], []>} : vector<8x4xf32>, vector<4x64xf32>, vector<8x64xf32> -> vector<8x64xf32>
    %c0_3 = arith.constant 0 : index
    %c0_4 = arith.constant 0 : index
    %3 = vector.load %arg3[%c0_3, %c0_4] : memref<1x64xf32, #tpu.memory_space<vmem>>, vector<1x64xf32>
    %4 = vector.broadcast %3 : vector<1x64xf32> to vector<8x64xf32>
    %5 = arith.addf %2, %4 : vector<8x64xf32>
    %cst_5 = arith.constant 1.000000e+00 : f32
    %6 = vector.broadcast %cst_5 : f32 to vector<64x1xf32>
    %cst_6 = arith.constant dense<0.000000e+00> : vector<8x1xf32>
    %7 = tpu.matmul %5, %6, %cst_6 {dimension_numbers = #tpu.dot_dimension_numbers<[1], [0], [0], [1], [0, 0, 1, 1], [], []>} : vector<8x64xf32>, vector<64x1xf32>, vector<8x1xf32> -> vector<8x1xf32>
    %cst_7 = arith.constant 1.562500e-02 : f32
    %8 = vector.broadcast %cst_7 : f32 to vector<8x1xf32>
    %9 = arith.mulf %7, %8 : vector<8x1xf32>
    %10 = vector.broadcast %9 : vector<8x1xf32> to vector<8x64xf32>
    %11 = arith.subf %5, %10 : vector<8x64xf32>
    %12 = arith.mulf %11, %11 : vector<8x64xf32>
    %cst_8 = arith.constant dense<0.000000e+00> : vector<8x1xf32>
    %13 = tpu.matmul %12, %6, %cst_8 {dimension_numbers = #tpu.dot_dimension_numbers<[1], [0], [0], [1], [0, 0, 1, 1], [], []>} : vector<8x64xf32>, vector<64x1xf32>, vector<8x1xf32> -> vector<8x1xf32>
    %cst_9 = arith.constant 1.562500e-02 : f32
    %14 = vector.broadcast %cst_9 : f32 to vector<8x1xf32>
    %15 = arith.mulf %13, %14 : vector<8x1xf32>
    %cst_10 = arith.constant 9.99999974E-6 : f32
    %16 = vector.broadcast %cst_10 : f32 to vector<8x1xf32>
    %17 = arith.addf %15, %16 : vector<8x1xf32>
    %18 = math.rsqrt %17 : vector<8x1xf32>
    %19 = vector.broadcast %18 : vector<8x1xf32> to vector<8x64xf32>
    %20 = arith.mulf %11, %19 : vector<8x64xf32>
    %cst_11 = arith.constant 0.000000e+00 : f32
    %21 = vector.broadcast %cst_11 : f32 to vector<8x64xf32>
    %22 = arith.maximumf %20, %21 : vector<8x64xf32>
    %c0_12 = arith.constant 0 : index
    %c0_13 = arith.constant 0 : index
    %23 = vector.load %arg4[%c0_12, %c0_13] : memref<64x256xf32, #tpu.memory_space<vmem>>, vector<64x256xf32>
    %cst_14 = arith.constant dense<0.000000e+00> : vector<8x256xf32>
    %24 = tpu.matmul %22, %23, %cst_14 {dimension_numbers = #tpu.dot_dimension_numbers<[1], [0], [0], [1], [0, 0, 1, 1], [], []>} : vector<8x64xf32>, vector<64x256xf32>, vector<8x256xf32> -> vector<8x256xf32>
    %c0_15 = arith.constant 0 : index
    %c0_16 = arith.constant 0 : index
    %25 = vector.load %arg5[%c0_15, %c0_16] : memref<1x256xf32, #tpu.memory_space<vmem>>, vector<1x256xf32>
    %26 = vector.broadcast %25 : vector<1x256xf32> to vector<8x256xf32>
    %27 = arith.addf %24, %26 : vector<8x256xf32>
    %cst_17 = arith.constant 0.000000e+00 : f32
    %28 = vector.broadcast %cst_17 : f32 to vector<8x256xf32>
    %29 = arith.maximumf %27, %28 : vector<8x256xf32>
    %c0_18 = arith.constant 0 : index
    %c0_19 = arith.constant 0 : index
    %30 = vector.load %arg6[%c0_18, %c0_19] : memref<8x256xf32, #tpu.memory_space<vmem>>, vector<8x256xf32>
    tpu.vector_store %arg6[%c0_18, %c0_19], %29 {strides = array<i32>} : memref<8x256xf32, #tpu.memory_space<vmem>>, vector<8x256xf32>,
    return
  }
  func.func @transform_0(%arg0: i32) -> (i32, i32) {
    %c0_i32 = arith.constant 0 : i32
    %c0_i32_0 = arith.constant 0 : i32
    return %arg0, %c0_i32 : i32, i32
  }
  func.func @transform_1(%arg0: i32) -> (i32, i32) {
    %c0_i32 = arith.constant 0 : i32
    %c0_i32_0 = arith.constant 0 : i32
    %c0_i32_1 = arith.constant 0 : i32
    return %c0_i32, %c0_i32_0 : i32, i32
  }
  func.func @transform_2(%arg0: i32) -> (i32, i32) {
    %c0_i32 = arith.constant 0 : i32
    %c0_i32_0 = arith.constant 0 : i32
    %c0_i32_1 = arith.constant 0 : i32
    return %c0_i32, %c0_i32_0 : i32, i32
  }
  func.func @transform_3(%arg0: i32) -> (i32, i32) {
    %c0_i32 = arith.constant 0 : i32
    %c0_i32_0 = arith.constant 0 : i32
    %c0_i32_1 = arith.constant 0 : i32
    return %c0_i32, %c0_i32_0 : i32, i32
  }
  func.func @transform_4(%arg0: i32) -> (i32, i32) {
    %c0_i32 = arith.constant 0 : i32
    %c0_i32_0 = arith.constant 0 : i32
    %c0_i32_1 = arith.constant 0 : i32
    return %c0_i32, %c0_i32_0 : i32, i32
  }
  func.func @transform_5(%arg0: i32) -> (i32, i32) {
    %c0_i32 = arith.constant 0 : i32
    %c0_i32_0 = arith.constant 0 : i32
    return %arg0, %c0_i32 : i32, i32
  }
}

</mosaic_0001>

<llo_original>
// kernel: _subgraph_impl.1
$region0: #{_subgraph_impl.1}
  #allocation0 [shape = 'u32[]', space=smem, size = 0x4, offset = 0x4, fixed_abs, tag = 'smem constant byte address 0x4 - core index']
  #allocation1 [shape = 'u32[144,128]{1,0:T(1,128)}', space=vmem, size = 0x12000, scoped, tag = 'internal scratch']
  %s0 = inlined_call_operand.vmem [shape: f32[2,4], index: 0, kind: input, shape index: {}]
  %s1 = inlined_call_operand.vmem [shape: f32[4,64], index: 1, kind: input, shape index: {}]
  %s2 = inlined_call_operand.vmem [shape: f32[1,64], index: 2, kind: input, shape index: {}]
  %s3 = inlined_call_operand.hbm [shape: f32[64,256], index: 3, kind: input, shape index: {}]
  %s4 = inlined_call_operand.vmem [shape: f32[1,256], index: 4, kind: input, shape index: {}]
  %s5 = inlined_call_operand.hbm [shape: f32[2,256], index: 5, kind: output, shape index: {}]
  %s6 = sld [smem:[#allocation0]]
  $region34: #{_subgraph_impl.1} parent=0
    _
  %s8 = ssub.s32 1, %s6
  %s9 = scalar_select 0, %s8, %s6
  $region1: #{_subgraph_impl.1} parent=0
    #allocation2 [shape = 'u8[65536]{0}', space=vmem, size = 0x10000, scoped, tag = 'input window, operand 3, single buffered']
    #allocation3 [shape = 's32[1]{0}', space=sflag, size = 0x4, scoped, tag = 'scoped memory for _subgraph_impl.1']
    #allocation4 [shape = 's32[1]{0}', space=sflag, size = 0x4, scoped, tag = 'scoped memory for _subgraph_impl.1']
    #allocation5 [shape = 'u8[8192]{0}', space=vmem, size = 0x2000, scoped, tag = 'output window, operand 0, single buffered']
    %10 = vsyncpa [#allocation3], 0
    %11 = vsyncpa [#allocation4], 0
    // Predicated region
    $region2: #{_subgraph_impl.1} parent=1 // pred_check
      _
    $region3: #{_subgraph_impl.1} parent=1 // pred_check_branch
      %13 = sbr.rel (0) target = $region5
    $region4: #{_subgraph_impl.1} parent=1 // pred_region
      _
    $region5: #{_subgraph_impl.1} parent=1 // pred_fallthru
      _
    // Predicated region
    $region6: #{_subgraph_impl.1} parent=1 // pred_check
      _
    $region7: #{_subgraph_impl.1} parent=1 // pred_check_branch
      %15 = sbr.rel (0) target = $region9
    $region8: #{_subgraph_impl.1} parent=1 // pred_region
      _
    $region9: #{_subgraph_impl.1} parent=1 // pred_fallthru
      _
    // Predicated region
    $region10: #{_subgraph_impl.1} parent=1 // pred_check
      _
    $region11: #{_subgraph_impl.1} parent=1 // pred_check_branch
      %17 = sbr.rel (0) target = $region13
    $region12: #{_subgraph_impl.1} parent=1 // pred_region
      _
    $region13: #{_subgraph_impl.1} parent=1 // pred_fallthru
      _
    // Predicated region
    $region14: #{_subgraph_impl.1} parent=1 // pred_check
      _
    $region15: #{_subgraph_impl.1} parent=1 // pred_check_branch
      %19 = sbr.rel (0) target = $region17
    $region16: #{_subgraph_impl.1} parent=1 // pred_region
      %s21 = ssub.s32 2048, 2048
      %22 = vsyncadd [#allocation3], %s21
      %s23 = sshll.u32 [#allocation2], 4
      %s24 = int_to_ptr.vmem [resolvable:$true] %s23
      %29 = dma.hbm_to_vmem [thread:$0]  %s3, 2048, %s24, [#allocation3], 256, 256, 16
    $region17: #{_subgraph_impl.1} parent=1 // pred_fallthru
      _
    // Predicated region
    $region18: #{_subgraph_impl.1} parent=1 // pred_check
      _
    $region19: #{_subgraph_impl.1} parent=1 // pred_check_branch
      %31 = sbr.rel (0) target = $region21
    $region20: #{_subgraph_impl.1} parent=1 // pred_region
      _
    $region21: #{_subgraph_impl.1} parent=1 // pred_fallthru
      _
    // Predicated region
    $region22: #{_subgraph_impl.1} parent=1 // pred_check
      _
    $region23: #{_subgraph_impl.1} parent=1 // pred_check_branch
      %33 = sbr.rel (0) target = $region25
    $region24: #{_subgraph_impl.1} parent=1 // pred_region
      %34 = dma.done [#allocation3], 2048
    $region25: #{_subgraph_impl.1} parent=1 // pred_fallthru
      _
    %v35 = vld [vmem:[%s0] sm:$0xff]
    %v36 = vld [vmem:[%s1] sm:$0xf]
    %v37 = vld [vmem:[%s2] sm:$0x1]
    %v39 = vlaneseq
    %v40 = vshrl.u32 %v39, 7
    %v41 = vsub.s32 0, %v40
    %v42 = vrot.slane %v37, %v41
    %vm44 = vcmask 31744
    %v46 = vsel %vm44, %v35, 0
    %vm48 = vcmask 1043456
    %v50 = vsel %vm48, %v36, 0
    %52 = vmatprep.subr.mxu0 0.0
    %53 = vmatpush1.msra.mxu0 %v50
    %54 = vmatprep.subr.mxu0 0.0
    %55 = vmatpush1.msra.mxu0 0.0
    %56 = vmatprep.subr.mxu0 0.0
    %57 = vmatpush1.msra.mxu0 0.0
    %58 = vmatprep.subr.mxu0 0.0
    %59 = vmatpush1.msra.mxu0 0.0
    %60 = vmatprep.subr.mxu0 0.0
    %61 = vmatpush1.msra.mxu0 0.0
    %62 = vmatprep.subr.mxu0 0.0
    %63 = vmatpush1.msra.mxu0 0.0
    %64 = vmatprep.subr.mxu0 0.0
    %65 = vmatpush1.msra.mxu0 0.0
    %66 = vmatprep.subr.mxu0 0.0
    %67 = vmatpush1.msra.mxu0 0.0
    %68 = vmatprep.subr.mxu0 0.0
    %69 = vmatpush1.msra.mxu0 0.0
    %70 = vmatprep.subr.mxu0 0.0
    %71 = vmatpush1.msra.mxu0 0.0
    %72 = vmatprep.subr.mxu0 0.0
    %73 = vmatpush1.msra.mxu0 0.0
    %74 = vmatprep.subr.mxu0 0.0
    %75 = vmatpush1.msra.mxu0 0.0
    %76 = vmatprep.subr.mxu0 0.0
    %77 = vmatpush1.msra.mxu0 0.0
    %78 = vmatprep.subr.mxu0 0.0
    %79 = vmatpush1.msra.mxu0 0.0
    %80 = vmatprep.subr.mxu0 0.0
    %81 = vmatpush1.msra.mxu0 0.0
    %82 = vmatprep.subr.mxu0 0.0
    %83 = vmatpush1.msra.mxu0 0.0
    %84 = vmatprep.subr.mxu0 0.0
    %85 = vmatpush1.msra.mxu0 0.0
    %86 = vmatprep.subr.mxu0 0.0
    %87 = vmatpush1.msra.mxu0 0.0
    %88 = vmatprep.subr.mxu0 0.0
    %89 = vmatpush1.msra.mxu0 0.0
    %90 = vmatprep.subr.mxu0 0.0
    %91 = vmatpush1.msra.mxu0 0.0
    %92 = vmatprep.subr.mxu0 0.0
    %93 = vmatpush1.msra.mxu0 0.0
    %94 = vmatprep.subr.mxu0 0.0
    %95 = vmatpush1.msra.mxu0 0.0
    %96 = vmatprep.subr.mxu0 0.0
    %97 = vmatpush1.msra.mxu0 0.0
    %98 = vmatprep.subr.mxu0 0.0
    %99 = vmatpush1.msra.mxu0 0.0
    %100 = vmatprep.subr.mxu0 0.0
    %101 = vmatpush1.msra.mxu0 0.0
    %102 = vmatprep.subr.mxu0 0.0
    %103 = vmatpush1.msra.mxu0 0.0
    %104 = vmatprep.subr.mxu0 0.0
    %105 = vmatpush1.msra.mxu0 0.0
    %106 = vmatprep.subr.mxu0 0.0
    %107 = vmatpush1.msra.mxu0 0.0
    %108 = vmatprep.subr.mxu0 0.0
    %109 = vmatpush1.msra.mxu0 0.0
    %110 = vmatprep.subr.mxu0 0.0
    %111 = vmatpush1.msra.mxu0 0.0
    %112 = vmatprep.subr.mxu0 0.0
    %113 = vmatpush1.msra.mxu0 0.0
    %114 = vmatprep.subr.mxu0 0.0
    %115 = vmatpush1.msra.mxu0 0.0
    %116 = vmatprep.mubr.f32.mxu0 0.0
    %117 = vmatmul.mubr.f32.gmra.mrb[0].mxu0 %v46
    %v118 = vpop.f32.mrb[0].mxu0
    %v119 = vadd.f32 %v42, %v118
    %v120 = vpop.f32.mrb[0].mxu0
    %121 = vdwg.mxu0
    %vm122 = vcmask 523264
    %v124 = vsel %vm122, %v119, 0
    %126 = vmatprep.subr.mxu0 0.0
    %127 = vmatpush1.msra.mxu0 1.0
    %128 = vmatprep.subr.mxu0 0.0
    %129 = vmatpush1.msra.mxu0 1.0
    %130 = vmatprep.subr.mxu0 0.0
    %131 = vmatpush1.msra.mxu0 1.0
    %132 = vmatprep.subr.mxu0 0.0
    %133 = vmatpush1.msra.mxu0 1.0
    %134 = vmatprep.subr.mxu0 0.0
    %135 = vmatpush1.msra.mxu0 1.0
    %136 = vmatprep.subr.mxu0 0.0
    %137 = vmatpush1.msra.mxu0 1.0
    %138 = vmatprep.subr.mxu0 0.0
    %139 = vmatpush1.msra.mxu0 1.0
    %140 = vmatprep.subr.mxu0 0.0
    %141 = vmatpush1.msra.mxu0 1.0
    %142 = vmatprep.subr.mxu0 0.0
    %143 = vmatpush1.msra.mxu0 0.0
    %144 = vmatprep.subr.mxu0 0.0
    %145 = vmatpush1.msra.mxu0 0.0
    %146 = vmatprep.subr.mxu0 0.0
    %147 = vmatpush1.msra.mxu0 0.0
    %148 = vmatprep.subr.mxu0 0.0
    %149 = vmatpush1.msra.mxu0 0.0
    %150 = vmatprep.subr.mxu0 0.0
    %151 = vmatpush1.msra.mxu0 0.0
    %152 = vmatprep.subr.mxu0 0.0
    %153 = vmatpush1.msra.mxu0 0.0
    %154 = vmatprep.subr.mxu0 0.0
    %155 = vmatpush1.msra.mxu0 0.0
    %156 = vmatprep.subr.mxu0 0.0
    %157 = vmatpush1.msra.mxu0 0.0
    %158 = vmatprep.subr.mxu0 0.0
    %159 = vmatpush1.msra.mxu0 0.0
    %160 = vmatprep.subr.mxu0 0.0
    %161 = vmatpush1.msra.mxu0 0.0
    %162 = vmatprep.subr.mxu0 0.0
    %163 = vmatpush1.msra.mxu0 0.0
    %164 = vmatprep.subr.mxu0 0.0
    %165 = vmatpush1.msra.mxu0 0.0
    %166 = vmatprep.subr.mxu0 0.0
    %167 = vmatpush1.msra.mxu0 0.0
    %168 = vmatprep.subr.mxu0 0.0
    %169 = vmatpush1.msra.mxu0 0.0
    %170 = vmatprep.subr.mxu0 0.0
    %171 = vmatpush1.msra.mxu0 0.0
    %172 = vmatprep.subr.mxu0 0.0
    %173 = vmatpush1.msra.mxu0 0.0
    %174 = vmatprep.subr.mxu0 0.0
    %175 = vmatpush1.msra.mxu0 0.0
    %176 = vmatprep.subr.mxu0 0.0
    %177 = vmatpush1.msra.mxu0 0.0
    %178 = vmatprep.subr.mxu0 0.0
    %179 = vmatpush1.msra.mxu0 0.0
    %180 = vmatprep.subr.mxu0 0.0
    %181 = vmatpush1.msra.mxu0 0.0
    %182 = vmatprep.subr.mxu0 0.0
    %183 = vmatpush1.msra.mxu0 0.0
    %184 = vmatprep.subr.mxu0 0.0
    %185 = vmatpush1.msra.mxu0 0.0
    %186 = vmatprep.subr.mxu0 0.0
    %187 = vmatpush1.msra.mxu0 0.0
    %188 = vmatprep.subr.mxu0 0.0
    %189 = vmatpush1.msra.mxu0 0.0
    %190 = vmatprep.mubr.f32.mxu0 0.0
    %191 = vmatmul.mubr.f32.gmra.mrb[0].mxu0 %v124
    %v192 = vpop.f32.mrb[0].mxu0
    %v193 = vadd.f32 0.0, %v192
    %v194 = vpop.f32.mrb[0].mxu0
    %195 = vdwg.mxu0
    %v196 = vmul.f32 %v193, 0.015625
    %198 = vset.pattern.permute.xlu0 0
    %199 = vperm.xlu0 %198, %v196
    %v200 = vpop.permute.xlu0 %199
    %v202 = vsub.f32 %v119, %v200
    %v203 = vmul.f32 %v202, %v202
    %v205 = vsel %vm122, %v203, 0
    %207 = vmatprep.subr.mxu0 0.0
    %208 = vmatpush1.msra.mxu0 1.0
    %209 = vmatprep.subr.mxu0 0.0
    %210 = vmatpush1.msra.mxu0 1.0
    %211 = vmatprep.subr.mxu0 0.0
    %212 = vmatpush1.msra.mxu0 1.0
    %213 = vmatprep.subr.mxu0 0.0
    %214 = vmatpush1.msra.mxu0 1.0
    %215 = vmatprep.subr.mxu0 0.0
    %216 = vmatpush1.msra.mxu0 1.0
    %217 = vmatprep.subr.mxu0 0.0
    %218 = vmatpush1.msra.mxu0 1.0
    %219 = vmatprep.subr.mxu0 0.0
    %220 = vmatpush1.msra.mxu0 1.0
    %221 = vmatprep.subr.mxu0 0.0
    %222 = vmatpush1.msra.mxu0 1.0
    %223 = vmatprep.subr.mxu0 0.0
    %224 = vmatpush1.msra.mxu0 0.0
    %225 = vmatprep.subr.mxu0 0.0
    %226 = vmatpush1.msra.mxu0 0.0
    %227 = vmatprep.subr.mxu0 0.0
    %228 = vmatpush1.msra.mxu0 0.0
    %229 = vmatprep.subr.mxu0 0.0
    %230 = vmatpush1.msra.mxu0 0.0
    %231 = vmatprep.subr.mxu0 0.0
    %232 = vmatpush1.msra.mxu0 0.0
    %233 = vmatprep.subr.mxu0 0.0
    %234 = vmatpush1.msra.mxu0 0.0
    %235 = vmatprep.subr.mxu0 0.0
    %236 = vmatpush1.msra.mxu0 0.0
    %237 = vmatprep.subr.mxu0 0.0
    %238 = vmatpush1.msra.mxu0 0.0
    %239 = vmatprep.subr.mxu0 0.0
    %240 = vmatpush1.msra.mxu0 0.0
    %241 = vmatprep.subr.mxu0 0.0
    %242 = vmatpush1.msra.mxu0 0.0
    %243 = vmatprep.subr.mxu0 0.0
    %244 = vmatpush1.msra.mxu0 0.0
    %245 = vmatprep.subr.mxu0 0.0
    %246 = vmatpush1.msra.mxu0 0.0
    %247 = vmatprep.subr.mxu0 0.0
    %248 = vmatpush1.msra.mxu0 0.0
    %249 = vmatprep.subr.mxu0 0.0
    %250 = vmatpush1.msra.mxu0 0.0
    %251 = vmatprep.subr.mxu0 0.0
    %252 = vmatpush1.msra.mxu0 0.0
    %253 = vmatprep.subr.mxu0 0.0
    %254 = vmatpush1.msra.mxu0 0.0
    %255 = vmatprep.subr.mxu0 0.0
    %256 = vmatpush1.msra.mxu0 0.0
    %257 = vmatprep.subr.mxu0 0.0
    %258 = vmatpush1.msra.mxu0 0.0
    %259 = vmatprep.subr.mxu0 0.0
    %260 = vmatpush1.msra.mxu0 0.0
    %261 = vmatprep.subr.mxu0 0.0
    %262 = vmatpush1.msra.mxu0 0.0
    %263 = vmatprep.subr.mxu0 0.0
    %264 = vmatpush1.msra.mxu0 0.0
    %265 = vmatprep.subr.mxu0 0.0
    %266 = vmatpush1.msra.mxu0 0.0
    %267 = vmatprep.subr.mxu0 0.0
    %268 = vmatpush1.msra.mxu0 0.0
    %269 = vmatprep.subr.mxu0 0.0
    %270 = vmatpush1.msra.mxu0 0.0
    %271 = vmatprep.mubr.f32.mxu0 0.0
    %272 = vmatmul.mubr.f32.gmra.mrb[0].mxu0 %v205
    %v273 = vpop.f32.mrb[0].mxu0
    %v274 = vadd.f32 0.0, %v273
    %v275 = vpop.f32.mrb[0].mxu0
    %276 = vdwg.mxu0
    %v277 = vmul.f32 %v274, 0.015625
    %v278 = vadd.f32 %v277, 1e-05
    %v279 = vrsqrt.pop %v278
    %281 = vset.pattern.permute.xlu0 0
    %282 = vperm.xlu0 %281, %v279
    %v283 = vpop.permute.xlu0 %282
    %v285 = vmul.f32 %v202, %v283
    %v286 = vmax.f32 %v285, 0.0
    %v287 = vld [vmem:[#allocation2] sm:$0xff]
    %v288 = vld [vmem:[#allocation2 + $0x8] sm:$0xff]
    %v289 = vld [vmem:[#allocation2 + $0x10] sm:$0xff]
    %v290 = vld [vmem:[#allocation2 + $0x18] sm:$0xff]
    %v291 = vld [vmem:[#allocation2 + $0x20] sm:$0xff]
    %v292 = vld [vmem:[#allocation2 + $0x28] sm:$0xff]
    %v293 = vld [vmem:[#allocation2 + $0x30] sm:$0xff]
    %v294 = vld [vmem:[#allocation2 + $0x38] sm:$0xff]
    %v295 = vld [vmem:[#allocation2 + $0x40] sm:$0xff]
    %v296 = vld [vmem:[#allocation2 + $0x48] sm:$0xff]
    %v297 = vld [vmem:[#allocation2 + $0x50] sm:$0xff]
    %v298 = vld [vmem:[#allocation2 + $0x58] sm:$0xff]
    %v299 = vld [vmem:[#allocation2 + $0x60] sm:$0xff]
    %v300 = vld [vmem:[#allocation2 + $0x68] sm:$0xff]
    %v301 = vld [vmem:[#allocation2 + $0x70] sm:$0xff]
    %v302 = vld [vmem:[#allocation2 + $0x78] sm:$0xff]
    %v303 = vld [vmem:[%s4] sm:$0x3]
    %v305 = vlaneseq
    %v306 = vshrl.u32 %v305, 7
    %v307 = vsub.s32 0, %v306
    %v308 = vrot.slane %v303, %v307
    %v309 = vlaneseq
    %v310 = vshrl.u32 %v309, 7
    %v311 = vsub.s32 1, %v310
    %v312 = vrot.slane %v303, %v311
    %v316 = vsel %vm122, %v286, 0
    %318 = vmatprep.subr.mxu0 %v288
    %319 = vmatpush1.msra.mxu0 %v287
    %320 = vmatprep.subr.mxu0 %v290
    %321 = vmatpush1.msra.mxu0 %v289
    %322 = vmatprep.subr.mxu0 %v292
    %323 = vmatpush1.msra.mxu0 %v291
    %324 = vmatprep.subr.mxu0 %v294
    %325 = vmatpush1.msra.mxu0 %v293
    %326 = vmatprep.subr.mxu0 %v296
    %327 = vmatpush1.msra.mxu0 %v295
    %328 = vmatprep.subr.mxu0 %v298
    %329 = vmatpush1.msra.mxu0 %v297
    %330 = vmatprep.subr.mxu0 %v300
    %331 = vmatpush1.msra.mxu0 %v299
    %332 = vmatprep.subr.mxu0 %v302
    %333 = vmatpush1.msra.mxu0 %v301
    %334 = vmatprep.subr.mxu0 0.0
    %335 = vmatpush1.msra.mxu0 0.0
    %336 = vmatprep.subr.mxu0 0.0
    %337 = vmatpush1.msra.mxu0 0.0
    %338 = vmatprep.subr.mxu0 0.0
    %339 = vmatpush1.msra.mxu0 0.0
    %340 = vmatprep.subr.mxu0 0.0
    %341 = vmatpush1.msra.mxu0 0.0
    %342 = vmatprep.subr.mxu0 0.0
    %343 = vmatpush1.msra.mxu0 0.0
    %344 = vmatprep.subr.mxu0 0.0
    %345 = vmatpush1.msra.mxu0 0.0
    %346 = vmatprep.subr.mxu0 0.0
    %347 = vmatpush1.msra.mxu0 0.0
    %348 = vmatprep.subr.mxu0 0.0
    %349 = vmatpush1.msra.mxu0 0.0
    %350 = vmatprep.subr.mxu0 0.0
    %351 = vmatpush1.msra.mxu0 0.0
    %352 = vmatprep.subr.mxu0 0.0
    %353 = vmatpush1.msra.mxu0 0.0
    %354 = vmatprep.subr.mxu0 0.0
    %355 = vmatpush1.msra.mxu0 0.0
    %356 = vmatprep.subr.mxu0 0.0
    %357 = vmatpush1.msra.mxu0 0.0
    %358 = vmatprep.subr.mxu0 0.0
    %359 = vmatpush1.msra.mxu0 0.0
    %360 = vmatprep.subr.mxu0 0.0
    %361 = vmatpush1.msra.mxu0 0.0
    %362 = vmatprep.subr.mxu0 0.0
    %363 = vmatpush1.msra.mxu0 0.0
    %364 = vmatprep.subr.mxu0 0.0
    %365 = vmatpush1.msra.mxu0 0.0
    %366 = vmatprep.subr.mxu0 0.0
    %367 = vmatpush1.msra.mxu0 0.0
    %368 = vmatprep.subr.mxu0 0.0
    %369 = vmatpush1.msra.mxu0 0.0
    %370 = vmatprep.subr.mxu0 0.0
    %371 = vmatpush1.msra.mxu0 0.0
    %372 = vmatprep.subr.mxu0 0.0
    %373 = vmatpush1.msra.mxu0 0.0
    %374 = vmatprep.subr.mxu0 0.0
    %375 = vmatpush1.msra.mxu0 0.0
    %376 = vmatprep.subr.mxu0 0.0
    %377 = vmatpush1.msra.mxu0 0.0
    %378 = vmatprep.subr.mxu0 0.0
    %379 = vmatpush1.msra.mxu0 0.0
    %380 = vmatprep.subr.mxu0 0.0
    %381 = vmatpush1.msra.mxu0 0.0
    %382 = vmatprep.mubr.f32.mxu0 0.0
    %383 = vmatmul.mubr.f32.gmra.mrb[0].mxu0 %v316
    %v384 = vpop.f32.mrb[0].mxu0
    %v385 = vadd.f32 %v308, %v384
    %v386 = vpop.f32.mrb[0].mxu0
    %v387 = vadd.f32 %v312, %v386
    %388 = vdwg.mxu0
    %v389 = vmax.f32 %v385, 0.0
    %v390 = vmax.f32 %v387, 0.0
    %v393 = vcombine.low %v389, %v390
    %v394 = vcombine.high %v389, %v390
    %v396 = vunpack.c.l.s4 1983009808
    %v397 = vunpack.c.0.s8 %v396
    %v398 = vlaneseq
    %v399 = vshrl.u32 %v398, 7
    %v400 = vsub.s32 %v397, %v399
    %v401 = vrot.slane %v393, %v400
    %v403 = vunpack.c.l.s4 1983009808
    %v404 = vunpack.c.0.s8 %v403
    %v405 = vlaneseq
    %v406 = vshrl.u32 %v405, 7
    %v407 = vsub.s32 %v404, %v406
    %v408 = vrot.slane %v394, %v407
    %v409 = vcombine.high %v401, %v401
    %v410 = vcombine.high %v408, %v408
    %415 = vst [vmem:[#allocation5] sm:$0xf] %v401
    %416 = vst [vmem:[#allocation5 + $0x4] sm:$0xf] %v409
    %417 = vst [vmem:[#allocation5 + $0x8] sm:$0xf] %v408
    %418 = vst [vmem:[#allocation5 + $0xc] sm:$0xf] %v410
    // Predicated region
    $region26: #{_subgraph_impl.1} parent=1 // pred_check
      _
    $region27: #{_subgraph_impl.1} parent=1 // pred_check_branch
      %420 = sbr.rel (0) target = $region29
    $region28: #{_subgraph_impl.1} parent=1 // pred_region
      %s422 = ssub.s32 256, 64
      %423 = vsyncadd [#allocation4], %s422
      %s424 = sshll.u32 [#allocation5], 4
      %s425 = int_to_ptr.vmem [resolvable:$true] %s424
      %430 = dma.vmem_to_hbm [thread:$0]  %s425, 64, %s5, [#allocation4], 64, 64, 4
    $region29: #{_subgraph_impl.1} parent=1 // pred_fallthru
      _
    // Predicated region
    $region30: #{_subgraph_impl.1} parent=1 // pred_check
      _
    $region31: #{_subgraph_impl.1} parent=1 // pred_check_branch
      %432 = sbr.rel (0) target = $region33
    $region32: #{_subgraph_impl.1} parent=1 // pred_region
      %433 = dma.done [#allocation4], 256
    $region33: #{_subgraph_impl.1} parent=1 // pred_fallthru
      _
    %434 = vsyncpa [#allocation3], 1
    %435 = vsyncpa [#allocation4], 1

</llo_original>
